<compile_context>
chip_gen: v5e
topology: v5e:2x2
jax: 0.10.0
libtpu: 0.0.40
codegen_flags: <defaults>
</compile_context>

<pallas_src>
import jax
import jax.numpy as jnp
from jax.experimental import pallas as pl
from jax.experimental.pallas import tpu as pltpu


def cnn_kernel(x_ref, m1_ref, b1_ref, m2_ref, b2_ref, lw_ref, lb_ref, o_ref):
    # fused conv1 + avgpool1 (+ bias, which commutes with the mean) + tanh
    h = jnp.tanh(
        jnp.dot(x_ref[...], m1_ref[...], preferred_element_type=jnp.float32)
        + b1_ref[0])
    # fused conv2 + avgpool2 + tanh
    g = jnp.tanh(
        jnp.dot(h, m2_ref[...], preferred_element_type=jnp.float32)
        + b2_ref[0])
    # Linear(L/16, 1): broadcast-multiply + lane reduce -> (tb, 1) column,
    # then relayout to a lane-dense (1, tb) row so the store is an unmasked vst.
    col = jnp.sum(g * lw_ref[...], axis=-1, keepdims=True) + lb_ref[0]   # (tb, 1)
    o_ref[...] = jax.nn.sigmoid(col).T                                   # (1, tb)


def _fused_matrices(c1w, c2w, L):
    """Build M1 = C1 @ P1 and M2 = C2 @ P2 with plain JAX, outside the kernel."""
    L1, L2 = L // 4, L // 16

    r = jnp.arange(L)[:, None]
    c = jnp.arange(L)[None, :]
    # conv1 (k=3, pad=1): y[c] = w0*x[c-1] + w1*x[c] + w2*x[c+1]   (zero padded)
    C1 = (jnp.where(r == c - 1, c1w[0], 0.0)
          + jnp.where(r == c, c1w[1], 0.0)
          + jnp.where(r == c + 1, c1w[2], 0.0)).astype(jnp.float32)
    d = jnp.arange(L)[:, None] - 4 * jnp.arange(L1)[None, :]
    P1 = jnp.where((d >= 0) & (d < 4), 0.25, 0.0).astype(jnp.float32)

    r2 = jnp.arange(L1)[:, None]
    c2 = jnp.arange(L1)[None, :]
    # conv2 (k=2, dilation=2, pad=1): y[c] = w0*x[c-1] + w1*x[c+1]
    C2 = (jnp.where(r2 == c2 - 1, c2w[0], 0.0)
          + jnp.where(r2 == c2 + 1, c2w[1], 0.0)).astype(jnp.float32)
    d2 = jnp.arange(L1)[:, None] - 4 * jnp.arange(L2)[None, :]
    P2 = jnp.where((d2 >= 0) & (d2 < 4), 0.25, 0.0).astype(jnp.float32)

    return C1 @ P1, C2 @ P2          # (L, L1), (L1, L2)


def _choose_tb(B, L):
    """Batch-tile rows: ~2 MiB x tiles, multiples of 128, grid >= 2 when B >= 256."""
    max_tb = (2 << 20) // (L * 4)                       # ~2 MiB per streamed tile
    max_tb = max(128, min(4096, (max_tb // 128) * 128))
    tb = max_tb
    while tb > 128 and B < 2 * tb:                      # keep both v7x TCs busy
        tb //= 2
    if B < 2 * tb:
        return B                                        # tiny batch: one full tile
    return tb


def cnn_net_pallas(x_ncl, params):
    """x_ncl: (B, 1, L) float32, PyTorch NCL layout.  Returns (B,) like CNNNet."""
    c1w, c1b, c2w, c2b, lw, lb = params
    x = jnp.squeeze(x_ncl, axis=1).astype(jnp.float32)        # (B, L)
    B, L = x.shape
    if L % 16 != 0:
        raise ValueError("fpLength must be a multiple of 16 (two kernel-4 avg pools)")
    L1, L2 = L // 4, L // 16
    M1, M2 = _fused_matrices(c1w, c2w, L)

    tb = _choose_tb(B, L)
    grid = (pl.cdiv(B, tb),)        # ragged batch -> masked tail block, no grid=(1,)

    smem = pl.BlockSpec(memory_space=pltpu.MemorySpace.SMEM)
    cost = pl.CostEstimate(
        flops=2 * B * (L * L1 + L1 * L2 + L2),
        transcendentals=B * (L1 + L2 + 1),
        bytes_accessed=4 * (B * L + B + L * L1 + L1 * L2 + L2 + 3),
    )

    # TODO(synk): if a deployment pins tb small with a long grid, pl.Buffered(3)
    # on the x BlockSpec would hide DMA issue latency; omitted here for simplicity.
    out = pl.pallas_call(
        cnn_kernel,
        out_shape=jax.ShapeDtypeStruct((1, B), jnp.float32),   # lane-dense along batch
        grid=grid,
        in_specs=[
            pl.BlockSpec((tb, L), lambda i: (i, 0)),           # streamed x tile
            pl.BlockSpec((L, L1), lambda i: (0, 0)),           # M1 (VMEM-resident)
            smem,                                              # b1 scalar
            pl.BlockSpec((L1, L2), lambda i: (0, 0)),          # M2 (VMEM-resident)
            smem,                                              # b2 scalar
            pl.BlockSpec((1, L2), lambda i: (0, 0)),           # linear weight
            smem,                                              # linear bias scalar
        ],
        out_specs=pl.BlockSpec((1, tb), lambda i: (0, i)),
        compiler_params=pltpu.CompilerParams(
            dimension_semantics=("parallel",)),
        cost_estimate=cost,
    )(x, M1, c1b, M2, c2b, lw, lb)
    return out[0]                                              # (B,) == PyTorch output


def cnn_net_reference(x_ncl, params):
    """Pure-JAX reference with identical semantics (for validation)."""
    c1w, c1b, c2w, c2b, lw, lb = params
    x = jnp.squeeze(x_ncl, axis=1).astype(jnp.float32)         # (B, L)
    B, L = x.shape
    xp = jnp.pad(x, ((0, 0), (1, 1)))
    h = c1w[0] * xp[:, :-2] + c1w[1] * xp[:, 1:-1] + c1w[2] * xp[:, 2:] + c1b[0]
    h = jnp.tanh(h.reshape(B, L // 4, 4).mean(-1))
    hp = jnp.pad(h, ((0, 0), (1, 1)))
    g = c2w[0] * hp[:, :-2] + c2w[1] * hp[:, 2:] + c2b[0]
    g = jnp.tanh(g.reshape(B, L // 16, 4).mean(-1))
    return jax.nn.sigmoid(g @ lw[0] + lb[0])                   # (B,)


if __name__ == "__main__":
    fpLength = 128          # fpLength is external config in score.py; chosen here
    L2 = fpLength // 16

    key = jax.random.PRNGKey(0)
    k = jax.random.split(key, 7)

    # deterministic synthetic parameters (PyTorch layer shapes)
    c1w = jax.random.uniform(k[1], (3,), jnp.float32, -0.5, 0.5)    # Conv1d(1,1,3) weight
    c1b = jax.random.uniform(k[2], (1,), jnp.float32, -0.5, 0.5)
    c2w = jax.random.uniform(k[3], (2,), jnp.float32, -0.5, 0.5)    # Conv1d(1,1,2,d=2) weight
    c2b = jax.random.uniform(k[4], (1,), jnp.float32, -0.5, 0.5)
    lw = jax.random.uniform(k[5], (1, L2), jnp.float32, -0.3, 0.3)  # Linear(L/16, 1) weight
    lb = jax.random.uniform(k[6], (1,), jnp.float32, -0.3, 0.3)
    params = (c1w, c1b, c2w, c2b, lw, lb)

    # case 1: tiny batch -> single full-array tile, grid=(1,)
    x_small = jax.random.normal(k[0], (8, 1, fpLength), dtype=jnp.float32)
    y = jax.block_until_ready(cnn_net_pallas(x_small, params))
    y_ref = cnn_net_reference(x_small, params)
    assert y.shape == (8,)
    assert jnp.allclose(y, y_ref, atol=1e-5, rtol=1e-5), (y, y_ref)

    # case 2: multi-tile batch with a ragged tail (tb=128, grid=3, masked edge block)
    x_big = jax.random.normal(k[0], (272, 1, fpLength), dtype=jnp.float32)
    y2 = jax.block_until_ready(cnn_net_pallas(x_big, params))
    y2_ref = cnn_net_reference(x_big, params)
    assert y2.shape == (272,)
    assert jnp.allclose(y2, y2_ref, atol=1e-5, rtol=1e-5), (y2, y2_ref)

    print("KERNEL_OK")
</pallas_src>

<mosaic_0001>
module attributes {stable_mosaic.version = 11 : i64} {
  func.func @cnn_kernel(%arg0: i32, %arg1: memref<8x128xf32, #tpu.memory_space<vmem>>, %arg2: memref<128x32xf32, #tpu.memory_space<vmem>>, %arg3: memref<1xf32, #tpu.memory_space<smem>>, %arg4: memref<32x8xf32, #tpu.memory_space<vmem>>, %arg5: memref<1xf32, #tpu.memory_space<smem>>, %arg6: memref<1x8xf32, #tpu.memory_space<vmem>>, %arg7: memref<1xf32, #tpu.memory_space<smem>>, %arg8: memref<1x8xf32, #tpu.memory_space<vmem>>) attributes {dimension_semantics = [#tpu.dimension_semantics<parallel>], iteration_bounds = array<i64: 1>, scalar_prefetch = 0 : i64, scratch_operands = 0 : i64, tpu.core_type = #tpu.core_type<tc>, window_params = [{transform_indices = @transform_0, window_bounds = array<i64: 8, 128>}, {pipeline_mode = #tpu.pipeline_mode<synchronous>, transform_indices = @transform_1, window_bounds = array<i64: 128, 32>}, {transform_indices = @transform_2, window_bounds = array<i64: 1>}, {pipeline_mode = #tpu.pipeline_mode<synchronous>, transform_indices = @transform_3, window_bounds = array<i64: 32, 8>}, {transform_indices = @transform_4, window_bounds = array<i64: 1>}, {pipeline_mode = #tpu.pipeline_mode<synchronous>, transform_indices = @transform_5, window_bounds = array<i64: 1, 8>}, {transform_indices = @transform_6, window_bounds = array<i64: 1>}, {transform_indices = @transform_7, window_bounds = array<i64: 1, 8>}]} {
    %c0 = arith.constant 0 : index
    %c0_0 = arith.constant 0 : index
    %0 = vector.load %arg1[%c0, %c0_0] : memref<8x128xf32, #tpu.memory_space<vmem>>, vector<8x128xf32>
    %c0_1 = arith.constant 0 : index
    %c0_2 = arith.constant 0 : index
    %1 = vector.load %arg2[%c0_1, %c0_2] : memref<128x32xf32, #tpu.memory_space<vmem>>, vector<128x32xf32>
    %cst = arith.constant dense<0.000000e+00> : vector<8x32xf32>
    %2 = tpu.matmul %0, %1, %cst {dimension_numbers = #tpu.dot_dimension_numbers<[1], [0], [0], [1], [0, 0, 1, 1], [], []>} : vector<8x128xf32>, vector<128x32xf32>, vector<8x32xf32> -> vector<8x32xf32>
    %c0_3 = arith.constant 0 : index
    %3 = memref.load %arg3[%c0_3] : memref<1xf32, #tpu.memory_space<smem>>
    %4 = vector.broadcast %3 : f32 to vector<8x32xf32>
    %5 = arith.addf %2, %4 : vector<8x32xf32>
    %6 = math.tanh %5 : vector<8x32xf32>
    %c0_4 = arith.constant 0 : index
    %c0_5 = arith.constant 0 : index
    %7 = vector.load %arg4[%c0_4, %c0_5] : memref<32x8xf32, #tpu.memory_space<vmem>>, vector<32x8xf32>
    %cst_6 = arith.constant dense<0.000000e+00> : vector<8x8xf32>
    %8 = tpu.matmul %6, %7, %cst_6 {dimension_numbers = #tpu.dot_dimension_numbers<[1], [0], [0], [1], [0, 0, 1, 1], [], []>} : vector<8x32xf32>, vector<32x8xf32>, vector<8x8xf32> -> vector<8x8xf32>
    %c0_7 = arith.constant 0 : index
    %9 = memref.load %arg5[%c0_7] : memref<1xf32, #tpu.memory_space<smem>>
    %10 = vector.broadcast %9 : f32 to vector<8x8xf32>
    %11 = arith.addf %8, %10 : vector<8x8xf32>
    %12 = math.tanh %11 : vector<8x8xf32>
    %c0_8 = arith.constant 0 : index
    %c0_9 = arith.constant 0 : index
    %13 = vector.load %arg6[%c0_8, %c0_9] : memref<1x8xf32, #tpu.memory_space<vmem>>, vector<1x8xf32>
    %14 = vector.broadcast %13 : vector<1x8xf32> to vector<8x8xf32>
    %15 = arith.mulf %12, %14 : vector<8x8xf32>
    %cst_10 = arith.constant dense<0.000000e+00> : vector<8xf32>
    %16 = vector.multi_reduction <add>, %15, %cst_10 [1] : vector<8x8xf32> to vector<8xf32>
    %17 = vector.shape_cast %16 : vector<8xf32> to vector<8x1xf32>
    %c0_11 = arith.constant 0 : index
    %18 = memref.load %arg7[%c0_11] : memref<1xf32, #tpu.memory_space<smem>>
    %19 = vector.broadcast %18 : f32 to vector<8x1xf32>
    %20 = arith.addf %17, %19 : vector<8x1xf32>
    %21 = arith.negf %20 : vector<8x1xf32>
    %22 = math.exp %21 : vector<8x1xf32>
    %cst_12 = arith.constant 1.000000e+00 : f32
    %23 = vector.broadcast %cst_12 : f32 to vector<8x1xf32>
    %24 = arith.addf %23, %22 : vector<8x1xf32>
    %25 = arith.divf %23, %24 : vector<8x1xf32>
    %26 = tpu.transpose %25, [1, 0] : vector<8x1xf32> -> vector<1x8xf32>
    %c0_13 = arith.constant 0 : index
    %c0_14 = arith.constant 0 : index
    %27 = vector.load %arg8[%c0_13, %c0_14] : memref<1x8xf32, #tpu.memory_space<vmem>>, vector<1x8xf32>
    tpu.vector_store %arg8[%c0_13, %c0_14], %26 {strides = array<i32>} : memref<1x8xf32, #tpu.memory_space<vmem>>, vector<1x8xf32>,
    return
  }
  func.func @transform_0(%arg0: i32) -> (i32, i32) {
    %c0_i32 = arith.constant 0 : i32
    %c0_i32_0 = arith.constant 0 : i32
    return %arg0, %c0_i32 : i32, i32
  }
  func.func @transform_1(%arg0: i32) -> (i32, i32) {
    %c0_i32 = arith.constant 0 : i32
    %c0_i32_0 = arith.constant 0 : i32
    %c0_i32_1 = arith.constant 0 : i32
    return %c0_i32, %c0_i32_0 : i32, i32
  }
  func.func @transform_2(%arg0: i32) -> i32 {
    %c0_i32 = arith.constant 0 : i32
    %c0_i32_0 = arith.constant 0 : i32
    return %c0_i32 : i32
  }
  func.func @transform_3(%arg0: i32) -> (i32, i32) {
    %c0_i32 = arith.constant 0 : i32
    %c0_i32_0 = arith.constant 0 : i32
    %c0_i32_1 = arith.constant 0 : i32
    return %c0_i32, %c0_i32_0 : i32, i32
  }
  func.func @transform_4(%arg0: i32) -> i32 {
    %c0_i32 = arith.constant 0 : i32
    %c0_i32_0 = arith.constant 0 : i32
    return %c0_i32 : i32
  }
  func.func @transform_5(%arg0: i32) -> (i32, i32) {
    %c0_i32 = arith.constant 0 : i32
    %c0_i32_0 = arith.constant 0 : i32
    %c0_i32_1 = arith.constant 0 : i32
    return %c0_i32, %c0_i32_0 : i32, i32
  }
  func.func @transform_6(%arg0: i32) -> i32 {
    %c0_i32 = arith.constant 0 : i32
    %c0_i32_0 = arith.constant 0 : i32
    return %c0_i32 : i32
  }
  func.func @transform_7(%arg0: i32) -> (i32, i32) {
    %c0_i32 = arith.constant 0 : i32
    %c0_i32_0 = arith.constant 0 : i32
    return %c0_i32, %arg0 : i32, i32
  }
}

</mosaic_0001>

<llo_original>
// kernel: tpu_custom_call.1
$region0: #{tpu_custom_call.1}
  #allocation0 [shape = 'u32[]', space=smem, size = 0x4, offset = 0x4, fixed_abs, tag = 'smem constant byte address 0x4 - core index']
  #allocation1 [shape = 'u32[72,128]{1,0:T(1,128)}', space=vmem, size = 0x9000, scoped, tag = 'internal scratch']
  #allocation2 [shape = 'f32[1]{0:T(128)S(6)}', space=smem, size = 0x200, scoped, tag = 'scoped memory for tpu_custom_call.1']
  #allocation3 [shape = 'f32[1]{0:T(128)S(6)}', space=smem, size = 0x200, scoped, tag = 'scoped memory for tpu_custom_call.1']
  #allocation4 [shape = 'f32[1]{0:T(128)S(6)}', space=smem, size = 0x200, scoped, tag = 'scoped memory for tpu_custom_call.1']
  %s0 = inlined_call_operand.vmem [shape: f32[8,128], index: 0, kind: input, shape index: {}]
  %s1 = inlined_call_operand.vmem [shape: f32[128,32], index: 1, kind: input, shape index: {}]
  %s2 = inlined_call_operand.<no memory space> [shape: f32[1], index: 2, kind: input, shape index: {}]
  %s3 = inlined_call_operand.vmem [shape: f32[32,8], index: 3, kind: input, shape index: {}]
  %s4 = inlined_call_operand.<no memory space> [shape: f32[1], index: 4, kind: input, shape index: {}]
  %s5 = inlined_call_operand.vmem [shape: f32[1,8], index: 5, kind: input, shape index: {}]
  %s6 = inlined_call_operand.<no memory space> [shape: f32[1], index: 6, kind: input, shape index: {}]
  %s7 = inlined_call_operand.hbm [shape: f32[1,8], index: 7, kind: output, shape index: {}]
  %s8 = sld [smem:[#allocation0]]
  $region38: #{tpu_custom_call.1} parent=0
    _
  %s10 = ssub.s32 1, %s8
  %s11 = scalar_select 0, %s10, %s8
  %12 = sst [smem:[#allocation2]] %s2
  %13 = sst [smem:[#allocation3]] %s4
  %14 = sst [smem:[#allocation4]] %s6
  $region1: #{tpu_custom_call.1} parent=0
    #allocation5 [shape = 'u8[512]{0}', space=vmem, size = 0x400, scoped, tag = 'output window, operand 0, single buffered']
    #allocation6 [shape = 's32[1]{0}', space=sflag, size = 0x4, scoped, tag = 'scoped memory for tpu_custom_call.1']
    %15 = vsyncpa [#allocation6], 0
    // Predicated region
    $region2: #{tpu_custom_call.1} parent=1 // pred_check
      _
    $region3: #{tpu_custom_call.1} parent=1 // pred_check_branch
      %17 = sbr.rel (0) target = $region5
    $region4: #{tpu_custom_call.1} parent=1 // pred_region
      _
    $region5: #{tpu_custom_call.1} parent=1 // pred_fallthru
      _
    // Predicated region
    $region6: #{tpu_custom_call.1} parent=1 // pred_check
      _
    $region7: #{tpu_custom_call.1} parent=1 // pred_check_branch
      %19 = sbr.rel (0) target = $region9
    $region8: #{tpu_custom_call.1} parent=1 // pred_region
      _
    $region9: #{tpu_custom_call.1} parent=1 // pred_fallthru
      _
    // Predicated region
    $region10: #{tpu_custom_call.1} parent=1 // pred_check
      _
    $region11: #{tpu_custom_call.1} parent=1 // pred_check_branch
      %21 = sbr.rel (0) target = $region13
    $region12: #{tpu_custom_call.1} parent=1 // pred_region
      _
    $region13: #{tpu_custom_call.1} parent=1 // pred_fallthru
      _
    // Predicated region
    $region14: #{tpu_custom_call.1} parent=1 // pred_check
      _
    $region15: #{tpu_custom_call.1} parent=1 // pred_check_branch
      %23 = sbr.rel (0) target = $region17
    $region16: #{tpu_custom_call.1} parent=1 // pred_region
      _
    $region17: #{tpu_custom_call.1} parent=1 // pred_fallthru
      _
    // Predicated region
    $region18: #{tpu_custom_call.1} parent=1 // pred_check
      _
    $region19: #{tpu_custom_call.1} parent=1 // pred_check_branch
      %25 = sbr.rel (0) target = $region21
    $region20: #{tpu_custom_call.1} parent=1 // pred_region
      _
    $region21: #{tpu_custom_call.1} parent=1 // pred_fallthru
      _
    // Predicated region
    $region22: #{tpu_custom_call.1} parent=1 // pred_check
      _
    $region23: #{tpu_custom_call.1} parent=1 // pred_check_branch
      %27 = sbr.rel (0) target = $region25
    $region24: #{tpu_custom_call.1} parent=1 // pred_region
      _
    $region25: #{tpu_custom_call.1} parent=1 // pred_fallthru
      _
    // Predicated region
    $region26: #{tpu_custom_call.1} parent=1 // pred_check
      _
    $region27: #{tpu_custom_call.1} parent=1 // pred_check_branch
      %29 = sbr.rel (0) target = $region29
    $region28: #{tpu_custom_call.1} parent=1 // pred_region
      _
    $region29: #{tpu_custom_call.1} parent=1 // pred_fallthru
      _
    %v30 = vld [vmem:[%s0] sm:$0xff]
    %v31 = vld [vmem:[%s1] sm:$0xff]
    %v32 = vld [vmem:[%s1 + $0x8] sm:$0xff]
    %v33 = vld [vmem:[%s1 + $0x10] sm:$0xff]
    %v34 = vld [vmem:[%s1 + $0x18] sm:$0xff]
    %v35 = vld [vmem:[%s1 + $0x20] sm:$0xff]
    %v36 = vld [vmem:[%s1 + $0x28] sm:$0xff]
    %v37 = vld [vmem:[%s1 + $0x30] sm:$0xff]
    %v38 = vld [vmem:[%s1 + $0x38] sm:$0xff]
    %v39 = vld [vmem:[%s1 + $0x40] sm:$0xff]
    %v40 = vld [vmem:[%s1 + $0x48] sm:$0xff]
    %v41 = vld [vmem:[%s1 + $0x50] sm:$0xff]
    %v42 = vld [vmem:[%s1 + $0x58] sm:$0xff]
    %v43 = vld [vmem:[%s1 + $0x60] sm:$0xff]
    %v44 = vld [vmem:[%s1 + $0x68] sm:$0xff]
    %v45 = vld [vmem:[%s1 + $0x70] sm:$0xff]
    %v46 = vld [vmem:[%s1 + $0x78] sm:$0xff]
    %s47 = sld [smem:[#allocation2]]
    %v48 = vstv %s47
    %49 = vmatpush.msra.mxu0 %v46
    %50 = vmatpush.msra.mxu0 %v45
    %51 = vmatpush.msra.mxu0 %v44
    %52 = vmatpush.msra.mxu0 %v43
    %53 = vmatpush.msra.mxu0 %v42
    %54 = vmatpush.msra.mxu0 %v41
    %55 = vmatpush.msra.mxu0 %v40
    %56 = vmatpush.msra.mxu0 %v39
    %57 = vmatpush.msra.mxu0 %v38
    %58 = vmatpush.msra.mxu0 %v37
    %59 = vmatpush.msra.mxu0 %v36
    %60 = vmatpush.msra.mxu0 %v35
    %61 = vmatpush.msra.mxu0 %v34
    %62 = vmatpush.msra.mxu0 %v33
    %63 = vmatpush.msra.mxu0 %v32
    %64 = vmatpush.msra.mxu0 %v31
    %65 = vmatmul.f32.gmra.mxu0 %v30
    %v66 = vpop.f32.mrf.mxu0
    %v67 = vadd.f32 %v48, %v66
    %68 = vdwg.mxu0
    %v69 = vtanh.pop %v67
    %v70 = vld [vmem:[%s3] sm:$0xff]
    %v71 = vld [vmem:[%s3 + $0x8] sm:$0xff]
    %v72 = vld [vmem:[%s3 + $0x10] sm:$0xff]
    %v73 = vld [vmem:[%s3 + $0x18] sm:$0xff]
    %s74 = sld [smem:[#allocation3]]
    %v75 = vstv %s74
    %vm76 = vcmask 261120
    %v78 = vsel %vm76, %v69, 0
    %80 = vmatpush.msra.mxu0 0.0
    %81 = vmatpush.msra.mxu0 0.0
    %82 = vmatpush.msra.mxu0 0.0
    %83 = vmatpush.msra.mxu0 0.0
    %84 = vmatpush.msra.mxu0 0.0
    %85 = vmatpush.msra.mxu0 0.0
    %86 = vmatpush.msra.mxu0 0.0
    %87 = vmatpush.msra.mxu0 0.0
    %88 = vmatpush.msra.mxu0 0.0
    %89 = vmatpush.msra.mxu0 0.0
    %90 = vmatpush.msra.mxu0 0.0
    %91 = vmatpush.msra.mxu0 0.0
    %92 = vmatpush.msra.mxu0 %v73
    %93 = vmatpush.msra.mxu0 %v72
    %94 = vmatpush.msra.mxu0 %v71
    %95 = vmatpush.msra.mxu0 %v70
    %96 = vmatmul.f32.gmra.mxu0 %v78
    %v97 = vpop.f32.mrf.mxu0
    %v98 = vadd.f32 %v75, %v97
    %99 = vdwg.mxu0
    %v100 = vtanh.pop %v98
    %v101 = vld [vmem:[%s5] sm:$0x1]
    %v103 = vperm.slane %v101, 0
    %v105 = vmul.f32 %v100, %v103
    %vm106 = vcmask 64512
    %v107 = vsel %vm106, %v105, 0.0
    %108 = vadd.xlane.f32.xlu0 %v107
    %v109 = vpop.xlane.xlu0 %108
    %s110 = sld [smem:[#allocation4]]
    %v111 = vstv %s110
    %v112 = vadd.f32 %v109, %v111
    %v113 = vxor.u32 %v112, 2147483648
    %v114 = vmul.f32 %v113, 1.442695
    %v115 = vpow.pop %v114
    %v116 = vadd.f32 %v115, 1.0
    %v117 = vrcp.pop %v116
    %v118 = vmul.f32 %v116, %v117
    %v119 = vsub.f32 1.0, %v118
    %v120 = vmul.f32 %v117, %v119
    %v121 = vadd.f32 %v117, %v120
    %vm122 = vweird.f32 %v116
    %vm123 = vweird.f32 %v117
    %vm124 = vmor %vm122, %vm123
    %v125 = vsel %vm124, %v117, %v121
    %v126 = vand.u32 2147483647, %v116
    %vm127 = vcmp.eq.f32.partialorder %v126, 8.507059e+37
    %v128 = vand.u32 %v116, 2147483648
    %v129 = vor.u32 1.1754944e-38, %v128
    %v130 = vsel %vm127, %v129, %v125
    %v131 = vmul.f32 1.0, %v130
    %132 = vxpose.xlu0.b32.start [1/16] %v131, 128
    %133 = vxpose.xlu0.b32.cont [2/16] 0.0, 128
    %134 = vxpose.xlu0.b32.cont [3/16] 0.0, 128
    %135 = vxpose.xlu0.b32.cont [4/16] 0.0, 128
    %136 = vxpose.xlu0.b32.cont [5/16] 0.0, 128
    %137 = vxpose.xlu0.b32.cont [6/16] 0.0, 128
    %138 = vxpose.xlu0.b32.cont [7/16] 0.0, 128
    %139 = vxpose.xlu0.b32.cont [8/16] 0.0, 128
    %140 = vxpose.xlu0.b32.cont [9/16] 0.0, 128
    %141 = vxpose.xlu0.b32.cont [10/16] 0.0, 128
    %142 = vxpose.xlu0.b32.cont [11/16] 0.0, 128
    %143 = vxpose.xlu0.b32.cont [12/16] 0.0, 128
    %144 = vxpose.xlu0.b32.cont [13/16] 0.0, 128
    %145 = vxpose.xlu0.b32.cont [14/16] 0.0, 128
    %146 = vxpose.xlu0.b32.cont [15/16] 0.0, 128
    %147 = vxpose.xlu0.b32.end [16/16] 0.0, 128
    %v148 = vpop.trf.xlu0
    %v149 = vpop.trf.xlu0
    %v150 = vpop.trf.xlu0
    %v151 = vpop.trf.xlu0
    %v152 = vpop.trf.xlu0
    %v153 = vpop.trf.xlu0
    %v154 = vpop.trf.xlu0
    %v155 = vpop.trf.xlu0
    %v156 = vpop.trf.xlu0
    %v157 = vpop.trf.xlu0
    %v158 = vpop.trf.xlu0
    %v159 = vpop.trf.xlu0
    %v160 = vpop.trf.xlu0
    %v161 = vpop.trf.xlu0
    %v162 = vpop.trf.xlu0
    %v163 = vpop.trf.xlu0
    %vm164 = vcmask 57344
    %165 = vst.msk [vmem:[#allocation5] sm:$0x1] %vm164, %v148
    // Predicated region
    $region30: #{tpu_custom_call.1} parent=1 // pred_check
      _
    $region31: #{tpu_custom_call.1} parent=1 // pred_check_branch
      %167 = sbr.rel (0) target = $region33
    $region32: #{tpu_custom_call.1} parent=1 // pred_region
      %169 = vsyncadd [#allocation6], 0
      %s171 = sshll.u32 [#allocation5], 4
      %s172 = int_to_ptr.vmem [resolvable:$true] %s171
      %s173 = sshll.u32 %s7, 4
      %s174 = int_to_ptr.hbm [resolvable:$true] %s173
      %176 = dma.vmem_to_hbm [thread:$0]  %s172, 16, %s174, [#allocation6]
    $region33: #{tpu_custom_call.1} parent=1 // pred_fallthru
      _
    // Predicated region
    $region34: #{tpu_custom_call.1} parent=1 // pred_check
      _
    $region35: #{tpu_custom_call.1} parent=1 // pred_check_branch
      %178 = sbr.rel (0) target = $region37
    $region36: #{tpu_custom_call.1} parent=1 // pred_region
      %180 = dma.done [#allocation6], 16
    $region37: #{tpu_custom_call.1} parent=1 // pred_fallthru
      _
    %181 = vsyncpa [#allocation6], 1

</llo_original>
